<compile_context>
chip_gen: v7x
topology: tpu7x:2x2x1
jax: 0.10.0
libtpu: 0.0.40
codegen_flags: <defaults>
</compile_context>

<pallas_src>
import jax
import jax.numpy as jnp
from jax.experimental import pallas as pl
from jax.experimental.pallas import tpu as pltpu


def _ce_kernel(logits_ref, target_ref, out_ref, acc_ref):
    j = pl.program_id(1)  # spatial (lane) tile index -- reduction axis

    @pl.when(j == 0)
    def _():
        acc_ref[...] = jnp.zeros_like(acc_ref)

    x = logits_ref[0].astype(jnp.float32)   # (C, T): classes on sublanes, pixels on lanes
    t = target_ref[0]                       # (1, T): int32 class ids

    # numerically stable log-softmax over the class axis (per-lane work)
    m = jnp.max(x, axis=0, keepdims=True)                          # (1, T)
    s = x - m                                                      # (C, T)
    lse = jnp.log(jnp.sum(jnp.exp(s), axis=0, keepdims=True))      # (1, T)

    # gather the target-class shifted logit via a class-index compare
    cls = jax.lax.broadcasted_iota(jnp.int32, x.shape, 0)          # (C, T)
    tgt = jnp.sum(jnp.where(cls == t, s, 0.0), axis=0, keepdims=True)  # (1, T)

    # per-lane accumulation: pure VPU add, no cross-lane reduce per step
    acc_ref[...] += lse - tgt

    @pl.when(j == pl.num_programs(1) - 1)
    def _():
        # single cross-lane reduce per batch block -> scalar partial sum
        out_ref[...] = jnp.sum(
            acc_ref[...], axis=-1, keepdims=True
        ).reshape(1, 1, 1)


def _pick_lane_tile(HW, C, itemsize, vmem_budget_bytes=8 << 20):
    """Largest spatial (lane) tile that divides HW, is a multiple of 128
    (or the full extent if HW isn't), and keeps the double-buffered input
    tiles + accumulator within a conservative VMEM budget."""
    if HW % 128 != 0:
        return HW  # full-extent lane block (masked lanes, still correct)
    per_lane = 2 * (C * itemsize + 4) + 4  # 2x-buffered logits+targets + f32 acc
    t = min(HW, max(128, (vmem_budget_bytes // per_lane) // 128 * 128))
    while HW % t != 0:
        t -= 128
    return t


def ce_loss(logits_nchw, target_nhw):
    """Mean cross-entropy over all batch elements and spatial positions,
    matching torch.nn.CrossEntropyLoss(size_average=True)."""
    N, C, H, W = logits_nchw.shape
    HW = H * W

    # Pure reshapes (contiguous dim merges) -- no HBM transpose pass.
    x = logits_nchw.reshape(N, C, HW)
    t = target_nhw.reshape(N, 1, HW).astype(jnp.int32)

    t_hw = _pick_lane_tile(HW, C, jnp.dtype(logits_nchw.dtype).itemsize)
    grid = (N, HW // t_hw)

    # TODO(synk): ignore_index=-100 (torch default) is not handled; targets
    # must be valid class ids in [0, C).
    # TODO(synk): for vocab-scale C, add an inner class-tile grid axis with an
    # online logsumexp so VMEM use stays independent of C (matters most on v7x).
    partial = pl.pallas_call(
        _ce_kernel,
        out_shape=jax.ShapeDtypeStruct((N, 1, 1), jnp.float32),
        grid_spec=pltpu.PrefetchScalarGridSpec(
            num_scalar_prefetch=0,
            grid=grid,
            in_specs=[
                pl.BlockSpec((1, C, t_hw), lambda b, j: (b, 0, j)),
                pl.BlockSpec((1, 1, t_hw), lambda b, j: (b, 0, j)),
            ],
            out_specs=pl.BlockSpec((1, 1, 1), lambda b, j: (b, 0, 0)),
            scratch_shapes=[pltpu.VMEM((1, t_hw), jnp.float32)],
        ),
        compiler_params=pltpu.CompilerParams(
            # batch blocks are independent -> shard across TensorCores (v7x);
            # spatial axis carries the resident accumulator -> arbitrary.
            dimension_semantics=("parallel", "arbitrary"),
            vmem_limit_bytes=64 * 1024 * 1024,
        ),
    )(x, t)

    return jnp.sum(partial) / jnp.float32(N * HW)


def _reference_ce(logits_nchw, target_nhw):
    # pure-JAX reference (matches torch.nn.CrossEntropyLoss, reduction='mean')
    N, C, H, W = logits_nchw.shape
    xr = jnp.transpose(logits_nchw, (0, 2, 3, 1)).reshape(-1, C).astype(jnp.float32)
    tr = target_nhw.reshape(-1)
    logp = jax.nn.log_softmax(xr, axis=-1)
    nll = -jnp.take_along_axis(logp, tr[:, None], axis=-1)[:, 0]
    return jnp.mean(nll)


if __name__ == "__main__":
    key = jax.random.PRNGKey(0)
    k1, k2 = jax.random.split(key)

    N, C, H, W = 2, 4, 16, 16
    logits = jax.random.normal(k1, (N, C, H, W), dtype=jnp.float32)
    target = jax.random.randint(k2, (N, H, W), 0, C, dtype=jnp.int32)

    loss = jax.jit(ce_loss)(logits, target)
    jax.block_until_ready(loss)

    ref = _reference_ce(logits, target)
    assert jnp.allclose(loss, ref, rtol=1e-5, atol=1e-5), (loss, ref)

    print("KERNEL_OK")
</pallas_src>

<mosaic_0001>
module attributes {stable_mosaic.version = 11 : i64} {
  func.func @_ce_kernel(%arg0: i32, %arg1: i32, %arg2: memref<1x4x256xf32, #tpu.memory_space<vmem>>, %arg3: memref<1x1x256xi32, #tpu.memory_space<vmem>>, %arg4: memref<1x1x1xf32, #tpu.memory_space<vmem>>, %arg5: memref<1x256xf32, #tpu.memory_space<vmem>>) attributes {dimension_semantics = [#tpu.dimension_semantics<parallel>, #tpu.dimension_semantics<arbitrary>], iteration_bounds = array<i64: 2, 1>, scalar_prefetch = 0 : i64, scratch_operands = 1 : i64, tpu.core_type = #tpu.core_type<tc>, window_params = [{transform_indices = @transform_0, window_bounds = array<i64: 1, 4, 256>}, {transform_indices = @transform_1, window_bounds = array<i64: 1, 1, 256>}, {transform_indices = @transform_2, window_bounds = array<i64: 1, 1, 1>}]} {
    %c0_i32 = arith.constant 0 : i32
    %0 = arith.cmpi eq, %arg1, %c0_i32 : i32
    %1 = arith.extui %0 : i1 to i32
    %c0_i32_0 = arith.constant 0 : i32
    %2 = arith.cmpi ne, %1, %c0_i32_0 : i32
    scf.if %2 {
      %cst_15 = arith.constant 0.000000e+00 : f32
      %29 = vector.broadcast %cst_15 : f32 to vector<1x256xf32>
      %c0_16 = arith.constant 0 : index
      %c0_17 = arith.constant 0 : index
      %30 = vector.load %arg5[%c0_16, %c0_17] : memref<1x256xf32, #tpu.memory_space<vmem>>, vector<1x256xf32>
      tpu.vector_store %arg5[%c0_16, %c0_17], %29 {strides = array<i32>} : memref<1x256xf32, #tpu.memory_space<vmem>>, vector<1x256xf32>,
    } else {
    }
    %c0 = arith.constant 0 : index
    %c0_1 = arith.constant 0 : index
    %c0_2 = arith.constant 0 : index
    %3 = vector.load %arg2[%c0, %c0_1, %c0_2] : memref<1x4x256xf32, #tpu.memory_space<vmem>>, vector<1x4x256xf32>
    %4 = vector.shape_cast %3 : vector<1x4x256xf32> to vector<4x256xf32>
    %c0_3 = arith.constant 0 : index
    %c0_4 = arith.constant 0 : index
    %c0_5 = arith.constant 0 : index
    %5 = vector.load %arg3[%c0_3, %c0_4, %c0_5] : memref<1x1x256xi32, #tpu.memory_space<vmem>>, vector<1x1x256xi32>
    %6 = vector.shape_cast %5 : vector<1x1x256xi32> to vector<1x256xi32>
    %cst = arith.constant dense<0xFF800000> : vector<256xf32>
    %7 = vector.multi_reduction <maximumf>, %4, %cst [0] : vector<4x256xf32> to vector<256xf32>
    %8 = vector.shape_cast %7 : vector<256xf32> to vector<1x256xf32>
    %9 = vector.broadcast %8 : vector<1x256xf32> to vector<4x256xf32>
    %10 = arith.subf %4, %9 : vector<4x256xf32>
    %11 = math.exp %10 : vector<4x256xf32>
    %cst_6 = arith.constant dense<0.000000e+00> : vector<256xf32>
    %12 = vector.multi_reduction <add>, %11, %cst_6 [0] : vector<4x256xf32> to vector<256xf32>
    %13 = vector.shape_cast %12 : vector<256xf32> to vector<1x256xf32>
    %14 = math.log %13 : vector<1x256xf32>
    %15 = tpu.iota {dimensions = array<i32: 0>} : vector<4x256xi32>
    %16 = vector.broadcast %6 : vector<1x256xi32> to vector<4x256xi32>
    %17 = arith.cmpi eq, %15, %16 : vector<4x256xi32>
    %cst_7 = arith.constant 0.000000e+00 : f32
    %18 = vector.broadcast %cst_7 : f32 to vector<4x256xf32>
    %19 = arith.select %17, %10, %18 : vector<4x256xi1>, vector<4x256xf32>
    %cst_8 = arith.constant dense<0.000000e+00> : vector<256xf32>
    %20 = vector.multi_reduction <add>, %19, %cst_8 [0] : vector<4x256xf32> to vector<256xf32>
    %21 = vector.shape_cast %20 : vector<256xf32> to vector<1x256xf32>
    %c0_9 = arith.constant 0 : index
    %c0_10 = arith.constant 0 : index
    %22 = vector.load %arg5[%c0_9, %c0_10] : memref<1x256xf32, #tpu.memory_space<vmem>>, vector<1x256xf32>
    %23 = arith.subf %14, %21 : vector<1x256xf32>
    %24 = arith.addf %22, %23 : vector<1x256xf32>
    %c0_11 = arith.constant 0 : index
    %c0_12 = arith.constant 0 : index
    %25 = vector.load %arg5[%c0_11, %c0_12] : memref<1x256xf32, #tpu.memory_space<vmem>>, vector<1x256xf32>
    tpu.vector_store %arg5[%c0_11, %c0_12], %24 {strides = array<i32>} : memref<1x256xf32, #tpu.memory_space<vmem>>, vector<1x256xf32>,
    %c0_i32_13 = arith.constant 0 : i32
    %26 = arith.cmpi eq, %arg1, %c0_i32_13 : i32
    %27 = arith.extui %26 : i1 to i32
    %c0_i32_14 = arith.constant 0 : i32
    %28 = arith.cmpi ne, %27, %c0_i32_14 : i32
    scf.if %28 {
      %c0_15 = arith.constant 0 : index
      %c0_16 = arith.constant 0 : index
      %29 = vector.load %arg5[%c0_15, %c0_16] : memref<1x256xf32, #tpu.memory_space<vmem>>, vector<1x256xf32>
      %cst_17 = arith.constant dense<0.000000e+00> : vector<1xf32>
      %30 = vector.multi_reduction <add>, %29, %cst_17 [1] : vector<1x256xf32> to vector<1xf32>
      %31 = vector.shape_cast %30 : vector<1xf32> to vector<1x1xf32>
      %32 = vector.shape_cast %31 : vector<1x1xf32> to vector<1x1x1xf32>
      %c0_18 = arith.constant 0 : index
      %c0_19 = arith.constant 0 : index
      %c0_20 = arith.constant 0 : index
      %33 = vector.load %arg4[%c0_18, %c0_19, %c0_20] : memref<1x1x1xf32, #tpu.memory_space<vmem>>, vector<1x1x1xf32>
      tpu.vector_store %arg4[%c0_18, %c0_19, %c0_20], %32 {strides = array<i32>} : memref<1x1x1xf32, #tpu.memory_space<vmem>>, vector<1x1x1xf32>,
    } else {
    }
    return
  }
  func.func @transform_0(%arg0: i32, %arg1: i32) -> (i32, i32, i32) {
    %c0_i32 = arith.constant 0 : i32
    %c0_i32_0 = arith.constant 0 : i32
    return %arg0, %c0_i32, %arg1 : i32, i32, i32
  }
  func.func @transform_1(%arg0: i32, %arg1: i32) -> (i32, i32, i32) {
    %c0_i32 = arith.constant 0 : i32
    %c0_i32_0 = arith.constant 0 : i32
    return %arg0, %c0_i32, %arg1 : i32, i32, i32
  }
  func.func @transform_2(%arg0: i32, %arg1: i32) -> (i32, i32, i32) {
    %c0_i32 = arith.constant 0 : i32
    %c0_i32_0 = arith.constant 0 : i32
    %c0_i32_1 = arith.constant 0 : i32
    return %arg0, %c0_i32, %c0_i32_0 : i32, i32, i32
  }
}

</mosaic_0001>

<llo_original>
// kernel: ce_loss.1
$region0: #{ce_loss.1}
  #allocation0 [shape = 'u32[]', space=smem, size = 0x4, offset = 0x4, fixed_abs, tag = 'smem constant byte address 0x4 - core index']
  #allocation1 [shape = 'u32[144,128]{1,0:T(1,128)}', space=vmem, size = 0x12000, scoped, tag = 'internal scratch']
  #allocation2 [shape = 'f32[1,256]{1,0:T(1,128)}', space=vmem, size = 0x400, scoped, tag = 'scratch operand']
  %s0 = inlined_call_operand.hbm [shape: f32[2,4,256], index: 0, kind: input, shape index: {}]
  %s1 = inlined_call_operand.hbm [shape: s32[2,1,256], index: 1, kind: input, shape index: {}]
  %s2 = inlined_call_operand.hbm [shape: f32[2,1,1], index: 2, kind: output, shape index: {}]
  %s3 = sld [smem:[#allocation0]]
  $region57: #{ce_loss.1} parent=0
    _
  %s5 = ssub.s32 1, %s3
  %s6 = scalar_select 0, %s5, %s3
  $region1: #{ce_loss.1} parent=0
    #allocation3 [shape = 'u8[8192]{0}', space=vmem, size = 0x2000, scoped, tag = 'input window, operand 0']
    #allocation4 [shape = 's32[2]{0}', space=sflag, size = 0x8, scoped, tag = 'scoped memory for ce_loss.1']
    #allocation5 [shape = 's32[2]{0}', space=sflag, size = 0x8, scoped, tag = 'scoped memory for ce_loss.1']
    #allocation6 [shape = 'u8[2048]{0}', space=vmem, size = 0x800, scoped, tag = 'input window, operand 1']
    #allocation7 [shape = 's32[2]{0}', space=sflag, size = 0x8, scoped, tag = 'scoped memory for ce_loss.1']
    #allocation8 [shape = 'u8[1024]{0}', space=vmem, size = 0x400, scoped, tag = 'output window, operand 0']
    %7 = vsyncpa [#allocation4], 0
    %s8 = scalar_lea.sflag [#allocation4], 1
    %9 = vsyncpa %s8, 0
    %10 = vsyncpa [#allocation7], 0
    %s11 = scalar_lea.sflag [#allocation7], 1
    %12 = vsyncpa %s11, 0
    %13 = vsyncpa [#allocation5], 0
    %s14 = scalar_lea.sflag [#allocation5], 1
    %15 = vsyncpa %s14, 0
    loop: start=0, step=1, limit=4
    $region2: #{ce_loss.1} parent=1 // loop_pre_header
      _
    $region3: #{ce_loss.1} parent=1 // loop_header
      %s17 = sphi 0, %s21
      %p18 = scmp.ge.s32.totalorder %s17, 4
      %s24 = sphi 0, %s36
      %s25 = sphi 0, %s32
      %s26 = sphi 0, %s24
      %s27 = sphi 0, %s25
      %s28 = sphi 0, %s26
      %s29 = sphi 0, %s27
      %s41 = sphi 0, %s43
      %s44 = sphi 0, %s41
      %s45 = sphi 0, %s44
      %s61 = sphi 0, %s45
      %s69 = sphi 0, %s71
      %s72 = sphi 0, %s69
      %s73 = sphi 0, %s72
      %s89 = sphi 0, %s73
      %s95 = sphi 0, %s97
      %s98 = sphi 0, %s95
      %s99 = sphi 0, %s98
      %s115 = sphi 0, %s99
    $region4: #{ce_loss.1} parent=1 // loop_header_branch
      %20 = sbr.rel (%p18) target = $region8
    $region5: #{ce_loss.1} parent=1 // loop_body
      %s22 = ssub.s32 %s17, 1
      %s23 = ssub.s32 %s17, 2
      %s30 = sadd.s32 1, %s25
      %p31 = scmp.ge.s32.totalorder %s30, 1
      %s32 = scalar_select %p31, 0, %s30
      %s33 = sadd.s32 1, %s24
      %s34 = scalar_select %p31, %s33, %s24
      %p35 = scmp.ge.s32.totalorder %s34, 2
      %s36 = scalar_select %p35, 0, %s34
      %s37 = ssub.s32 %s24, %s36
      %s38 = ssub.s32 %s25, %s32
      %s39 = sor.u32 %s37, %s38
      %p40 = scmp.eq.s32.totalorder %s39, 0
      %s42 = sadd.s32 %s41, 1
      %s43 = scalar_select %p40, %s41, %s42
      %p46 = pneg %p40
      %p47 = scmp.eq.s32.totalorder %s17, 1
      %p48 = por %p46, %p47
      %p49 = scmp.ne.s32.totalorder %s41, %s44
      %p50 = scmp.eq.s32.totalorder %s17, 0
      %p51 = por %p49, %p50
      %p52 = scmp.ne.s32.totalorder %s41, %s44
      %p53 = scmp.eq.s32.totalorder %s22, 1
      %p54 = por %p52, %p53
      %p55 = scmp.ne.s32.totalorder %s44, %s45
      %p56 = scmp.eq.s32.totalorder %s22, 0
      %p57 = por %p55, %p56
      %p58 = scmp.ne.s32.totalorder %s44, %s45
      %p59 = scmp.eq.s32.totalorder %s23, 1
      %p60 = por %p58, %p59
      %p62 = scmp.ne.s32.totalorder %s45, %s61
      %p63 = scmp.eq.s32.totalorder %s23, 0
      %p64 = por %p62, %p63
      %s65 = ssub.s32 %s24, %s36
      %s66 = ssub.s32 %s25, %s32
      %s67 = sor.u32 %s65, %s66
      %p68 = scmp.eq.s32.totalorder %s67, 0
      %s70 = sadd.s32 %s69, 1
      %s71 = scalar_select %p68, %s69, %s70
      %p74 = pneg %p68
      %p75 = scmp.eq.s32.totalorder %s17, 1
      %p76 = por %p74, %p75
      %p77 = scmp.ne.s32.totalorder %s69, %s72
      %p78 = scmp.eq.s32.totalorder %s17, 0
      %p79 = por %p77, %p78
      %p80 = scmp.ne.s32.totalorder %s69, %s72
      %p81 = scmp.eq.s32.totalorder %s22, 1
      %p82 = por %p80, %p81
      %p83 = scmp.ne.s32.totalorder %s72, %s73
      %p84 = scmp.eq.s32.totalorder %s22, 0
      %p85 = por %p83, %p84
      %p86 = scmp.ne.s32.totalorder %s72, %s73
      %p87 = scmp.eq.s32.totalorder %s23, 1
      %p88 = por %p86, %p87
      %p90 = scmp.ne.s32.totalorder %s73, %s89
      %p91 = scmp.eq.s32.totalorder %s23, 0
      %p92 = por %p90, %p91
      %s93 = ssub.s32 %s24, %s36
      %p94 = scmp.eq.s32.totalorder %s93, 0
      %s96 = sadd.s32 %s95, 1
      %s97 = scalar_select %p94, %s95, %s96
      %p100 = pneg %p94
      %p101 = scmp.eq.s32.totalorder %s17, 1
      %p102 = por %p100, %p101
      %p103 = scmp.ne.s32.totalorder %s95, %s98
      %p104 = scmp.eq.s32.totalorder %s17, 0
      %p105 = por %p103, %p104
      %p106 = scmp.ne.s32.totalorder %s95, %s98
      %p107 = scmp.eq.s32.totalorder %s22, 1
      %p108 = por %p106, %p107
      %p109 = scmp.ne.s32.totalorder %s98, %s99
      %p110 = scmp.eq.s32.totalorder %s22, 0
      %p111 = por %p109, %p110
      %p112 = scmp.ne.s32.totalorder %s98, %s99
      %p113 = scmp.eq.s32.totalorder %s23, 1
      %p114 = por %p112, %p113
      %p116 = scmp.ne.s32.totalorder %s99, %s115
      %p117 = scmp.eq.s32.totalorder %s23, 0
      %p118 = por %p116, %p117
      %p119 = scmp.le.s32.totalorder 1, %s17
      %p120 = scmp.lt.s32.totalorder %s17, 3
      %p121 = pnand %p119, %p120
      %p122 = pneg %p121
      // Predicated region
      $region9: #{ce_loss.1} parent=5 // pred_check
        _
      $region10: #{ce_loss.1} parent=5 // pred_check_branch
        %124 = sbr.rel (%p121) target = $region12
      $region11: #{ce_loss.1} parent=5 // pred_region
        %s125 = ssub.s32 %s17, 1
      $region12: #{ce_loss.1} parent=5 // pred_fallthru
        _
      %p126 = scmp.lt.s32.totalorder %s17, 2
      // Predicated region
      $region13: #{ce_loss.1} parent=5 // pred_check
        %p127 = pneg %p126
      $region14: #{ce_loss.1} parent=5 // pred_check_branch
        %129 = sbr.rel (%p127) target = $region16
      $region15: #{ce_loss.1} parent=5 // pred_region
        // Predicated region
        $region17: #{ce_loss.1} parent=15 // pred_check
          %p130 = pneg %p51
        $region18: #{ce_loss.1} parent=15 // pred_check_branch
          %132 = sbr.rel (%p130) target = $region20
        $region19: #{ce_loss.1} parent=15 // pred_region
          %s133 = sand.u32 %s41, 1
          %s134 = scalar_lea.sflag [#allocation4], %s133
          %s135 = sand.u32 %s41, 1
          %s136 = smul.addr %s135, 8
          %s137 = scalar_lea.vmem [#allocation3], %s136
          %s138 = smul.u32 2, %s25
          %s140 = ssub.s32 128, 128
          %141 = vsyncadd %s134, %s140
          %s142 = smul.addr %s24, 2
          %s143 = sadd.s32 %s138, %s142
          %s144 = smul.addr %s143, 64
          %s145 = scalar_lea.hbm %s0, %s144
          %s147 = sshll.u32 %s137, 4
          %s148 = int_to_ptr.vmem [resolvable:$true] %s147
          %150 = dma.hbm_to_vmem [thread:$0]  %s145, 128, %s148, %s134
        $region20: #{ce_loss.1} parent=15 // pred_fallthru
          _
        // Predicated region
        $region21: #{ce_loss.1} parent=15 // pred_check
          %p151 = pneg %p79
        $region22: #{ce_loss.1} parent=15 // pred_check_branch
          %153 = sbr.rel (%p151) target = $region24
        $region23: #{ce_loss.1} parent=15 // pred_region
          %s154 = sand.u32 %s69, 1
          %s155 = scalar_lea.sflag [#allocation7], %s154
          %s156 = sand.u32 %s69, 1
          %s157 = smul.addr %s156, 2
          %s158 = scalar_lea.vmem [#allocation6], %s157
          %s159 = smul.u32 2, %s25
          %s161 = ssub.s32 32, 32
          %162 = vsyncadd %s155, %s161
          %s163 = smul.addr %s24, 2
          %s164 = sadd.s32 %s159, %s163
          %s165 = smul.addr %s164, 16
          %s166 = scalar_lea.hbm %s1, %s165
          %s168 = sshll.u32 %s158, 4
          %s169 = int_to_ptr.vmem [resolvable:$true] %s168
          %171 = dma.hbm_to_vmem [thread:$0]  %s166, 32, %s169, %s155
        $region24: #{ce_loss.1} parent=15 // pred_fallthru
          _
      $region16: #{ce_loss.1} parent=5 // pred_fallthru
        _
      %p172 = scmp.le.s32.totalorder 1, %s17
      %p173 = scmp.lt.s32.totalorder %s17, 3
      %p174 = pnand %p172, %p173
      %p175 = pneg %p174
      // Predicated region
      $region25: #{ce_loss.1} parent=5 // pred_check
        _
      $region26: #{ce_loss.1} parent=5 // pred_check_branch
        %177 = sbr.rel (%p174) target = $region28
      $region27: #{ce_loss.1} parent=5 // pred_region
        %s178 = ssub.s32 %s17, 1
        %s179 = sand.u32 %s44, 1
        %s180 = scalar_lea.sflag [#allocation4], %s179
        %s181 = sand.u32 %s44, 1
        %s182 = smul.addr %s181, 8
        %s183 = scalar_lea.vmem [#allocation3], %s182
        // Predicated region
        $region29: #{ce_loss.1} parent=27 // pred_check
          %p184 = pneg %p57
        $region30: #{ce_loss.1} parent=27 // pred_check_branch
          %186 = sbr.rel (%p184) target = $region32
        $region31: #{ce_loss.1} parent=27 // pred_region
          %187 = dma.done %s180, 128
        $region32: #{ce_loss.1} parent=27 // pred_fallthru
          _
        %s188 = sand.u32 %s72, 1
        %s189 = scalar_lea.sflag [#allocation7], %s188
        %s190 = sand.u32 %s72, 1
        %s191 = smul.addr %s190, 2
        %s192 = scalar_lea.vmem [#allocation6], %s191
        // Predicated region
        $region33: #{ce_loss.1} parent=27 // pred_check
          %p193 = pneg %p85
        $region34: #{ce_loss.1} parent=27 // pred_check_branch
          %195 = sbr.rel (%p193) target = $region36
        $region35: #{ce_loss.1} parent=27 // pred_region
          %196 = dma.done %s189, 32
        $region36: #{ce_loss.1} parent=27 // pred_fallthru
          _
        %s197 = sand.u32 %s44, 1
        %s198 = scalar_lea.sflag [#allocation4], %s197
        %s199 = sand.u32 %s44, 1
        %s200 = smul.addr %s199, 8
        %s201 = scalar_lea.vmem [#allocation3], %s200
        %p202 = pneg %p57
        %p203 = pneg %p54
        %s204 = sand.u32 %s72, 1
        %s205 = scalar_lea.sflag [#allocation7], %s204
        %s206 = sand.u32 %s72, 1
        %s207 = smul.addr %s206, 2
        %s208 = scalar_lea.vmem [#allocation6], %s207
        %p209 = pneg %p85
        %p210 = pneg %p82
        %p211 = pneg %p111
        %p212 = pneg %p108
        %s213 = sand.u32 %s98, 1
        %s214 = scalar_lea.sflag [#allocation5], %s213
        %s215 = sand.u32 %s98, 1
        %s216 = scalar_lea.vmem [#allocation8], %s215
        %s217 = smul.u32 2, %s27
        %s218 = smul.u32 2, %s27
        %p219 = scmp.eq.s32.totalorder %s27, 0
        // Predicated region
        $region37: #{ce_loss.1} parent=27 // pred_check
          %p220 = pneg %p219
        $region38: #{ce_loss.1} parent=27 // pred_check_branch
          %222 = sbr.rel (%p220) target = $region40
        $region39: #{ce_loss.1} parent=27 // pred_region
          %v223 = vlaneseq
          %vm224 = vcmp.ge.s32.totalorder %v223, 0
          %vm225 = vcmp.lt.s32.totalorder %v223, 256
          %vm226 = vmand %vm224, %vm225
          %227 = vst.msk [vmem:[#allocation2] sm:$0x3] %vm226, 0.0
        $region40: #{ce_loss.1} parent=27 // pred_fallthru
          _
        %v228 = vld [vmem:[%s183] sm:$0xff]
        %v229 = vld [vmem:[%s192] sm:$0x3]
        %v231 = vcombine.high %v228, %v228
        %vm233 = vcmask 1043456
        %v234 = vsel %vm233, %v228, -inf
        %v235 = vrot.slane %v234, 4
        %v236 = vmax.f32 %v234, %v235
        %v237 = vrot.slane %v236, 2
        %v238 = vmax.f32 %v236, %v237
        %v239 = vrot.slane %v238, 1
        %v240 = vmax.f32 %v238, %v239
        %v241 = vsel %vm233, %v231, -inf
        %v242 = vrot.slane %v241, 4
        %v243 = vmax.f32 %v241, %v242
        %v244 = vrot.slane %v243, 2
        %v245 = vmax.f32 %v243, %v244
        %v246 = vrot.slane %v245, 1
        %v247 = vmax.f32 %v245, %v246
        %v250 = vcombine.low %v240, %v247
        %v252 = vsub.f32 %v228, %v250
        %v253 = vmul.f32 %v252, 1.442695
        %v254 = vpow.pop %v253
        %v256 = vcombine.high %v254, %v254
        %v258 = vsel %vm233, %v254, 0.0
        %v259 = vrot.slane %v258, 4
        %v260 = vadd.f32 %v258, %v259
        %v261 = vrot.slane %v260, 2
        %v262 = vadd.f32 %v260, %v261
        %v263 = vrot.slane %v262, 1
        %v264 = vadd.f32 %v262, %v263
        %v265 = vsel %vm233, %v256, 0.0
        %v266 = vrot.slane %v265, 4
        %v267 = vadd.f32 %v265, %v266
        %v268 = vrot.slane %v267, 2
        %v269 = vadd.f32 %v267, %v268
        %v270 = vrot.slane %v269, 1
        %v271 = vadd.f32 %v269, %v270
        %v272 = vlog2.pop %v264
        %v273 = vmul.f32 %v272, 0.6931472
        %v274 = vlog2.pop %v271
        %v275 = vmul.f32 %v274, 0.6931472
        %v276 = vlaneseq
        %v277 = vshrl.u32 %v276, 7
        %v278 = vlaneseq
        %v279 = vshrl.u32 %v278, 7
        %v280 = vsub.s32 0, %v279
        %v281 = vrot.slane %v229, %v280
        %v282 = vlaneseq
        %v283 = vshrl.u32 %v282, 7
        %v284 = vsub.s32 1, %v283
        %v285 = vrot.slane %v229, %v284
        %vm286 = vcmp.eq.s32.totalorder %v277, %v281
        %vm287 = vcmp.eq.s32.totalorder %v277, %v285
        %v289 = vcombine.high %v252, %v252
        %v291 = vsel %vm286, %v252, 0.0
        %v292 = vsel %vm287, %v289, 0.0
        %v293 = vsel %vm233, %v291, 0.0
        %v294 = vrot.slane %v293, 4
        %v295 = vadd.f32 %v293, %v294
        %v296 = vrot.slane %v295, 2
        %v297 = vadd.f32 %v295, %v296
        %v298 = vrot.slane %v297, 1
        %v299 = vadd.f32 %v297, %v298
        %v300 = vsel %vm233, %v292, 0.0
        %v301 = vrot.slane %v300, 4
        %v302 = vadd.f32 %v300, %v301
        %v303 = vrot.slane %v302, 2
        %v304 = vadd.f32 %v302, %v303
        %v305 = vrot.slane %v304, 1
        %v306 = vadd.f32 %v304, %v305
        %v307 = vld [vmem:[#allocation2] sm:$0x3]
        %v308 = vsub.f32 %v273, %v299
        %v309 = vsub.f32 %v275, %v306
        %v312 = vcombine.low %v308, %v309
        %v314 = vunpack.c.l.s4 1966171168
        %v315 = vunpack.c.0.s8 %v314
        %v316 = vlaneseq
        %v317 = vshrl.u32 %v316, 7
        %v318 = vsub.s32 %v315, %v317
        %v319 = vrot.slane %v312, %v318
        %v321 = vunpack.c.l.s4 1966171168
        %v322 = vunpack.c.0.s8 %v321
        %v323 = vlaneseq
        %v324 = vshrl.u32 %v323, 7
        %v325 = vsub.s32 %v322, %v324
        %v326 = vrot.slane %v319, %v325
        %v328 = vadd.f32 %v307, %v326
        %v329 = vlaneseq
        %vm330 = vcmp.ge.s32.totalorder %v329, 0
        %vm331 = vcmp.lt.s32.totalorder %v329, 256
        %vm332 = vmand %vm330, %vm331
        %333 = vst.msk [vmem:[#allocation2] sm:$0x3] %vm332, %v328
        // Predicated region
        $region41: #{ce_loss.1} parent=27 // pred_check
          %p334 = pneg %p219
        $region42: #{ce_loss.1} parent=27 // pred_check_branch
          %336 = sbr.rel (%p334) target = $region44
        $region43: #{ce_loss.1} parent=27 // pred_region
          %v337 = vld [vmem:[#allocation2] sm:$0x3]
          %v339 = vlaneseq
          %v340 = vshrl.u32 %v339, 7
          %v341 = vsub.s32 0, %v340
          %v342 = vrot.slane %v337, %v341
          %v343 = vlaneseq
          %v344 = vshrl.u32 %v343, 7
          %v345 = vsub.s32 1, %v344
          %v346 = vrot.slane %v337, %v345
          %vm349 = vcmask 1040384
          %v350 = vsel %vm349, %v342, 0.0
          %v351 = vsel %vm349, %v346, 0.0
          %v352 = vadd.f32 %v350, %v351
          %353 = vadd.xlane.f32.xlu0 %v352
          %v354 = vpop.xlane.xlu0 %353
          %vm355 = vcmask 0
          %356 = vst.msk [vmem:[%s216] sm:$0x1] %vm355, %v354
        $region44: #{ce_loss.1} parent=27 // pred_fallthru
          _
        %s357 = sand.u32 %s98, 1
        %s358 = scalar_lea.sflag [#allocation5], %s357
        %s359 = sand.u32 %s98, 1
        %s360 = scalar_lea.vmem [#allocation8], %s359
        // Predicated region
        $region45: #{ce_loss.1} parent=27 // pred_check
          %p361 = pneg %p108
        $region46: #{ce_loss.1} parent=27 // pred_check_branch
          %363 = sbr.rel (%p361) target = $region48
        $region47: #{ce_loss.1} parent=27 // pred_region
          %s365 = ssub.s32 16, 16
          %366 = vsyncadd %s358, %s365
          %s367 = smul.addr %s26, 16
          %s368 = scalar_lea.hbm %s2, %s367
          %s370 = sshll.u32 %s360, 4
          %s371 = int_to_ptr.vmem [resolvable:$true] %s370
          %373 = dma.vmem_to_hbm [thread:$0]  %s371, 16, %s368, %s358
        $region48: #{ce_loss.1} parent=27 // pred_fallthru
          _
      $region28: #{ce_loss.1} parent=5 // pred_fallthru
        _
      %p374 = scmp.le.s32.totalorder 2, %s17
      // Predicated region
      $region49: #{ce_loss.1} parent=5 // pred_check
        %p375 = pneg %p374
      $region50: #{ce_loss.1} parent=5 // pred_check_branch
        %377 = sbr.rel (%p375) target = $region52
      $region51: #{ce_loss.1} parent=5 // pred_region
        %s378 = ssub.s32 %s17, 2
        // Predicated region
        $region53: #{ce_loss.1} parent=51 // pred_check
          %p379 = pneg %p114
        $region54: #{ce_loss.1} parent=51 // pred_check_branch
          %381 = sbr.rel (%p379) target = $region56
        $region55: #{ce_loss.1} parent=51 // pred_region
          %s382 = sand.u32 %s99, 1
          %s383 = scalar_lea.sflag [#allocation5], %s382
          %s384 = sand.u32 %s99, 1
          %s385 = scalar_lea.vmem [#allocation8], %s384
          %386 = dma.done %s383, 16
        $region56: #{ce_loss.1} parent=51 // pred_fallthru
          _
      $region52: #{ce_loss.1} parent=5 // pred_fallthru
        _
    $region6: #{ce_loss.1} parent=1 // loop_footer
      %s21 = sadd.s32 1, %s17
    $region7: #{ce_loss.1} parent=1 // loop_footer_branch
      %16 = sbr.rel target = $region3
    $region8: #{ce_loss.1} parent=1 // loop_exit
      _
    %387 = vsyncpa [#allocation4], 1
    %s388 = scalar_lea.sflag [#allocation4], 1
    %389 = vsyncpa %s388, 1
    %390 = vsyncpa [#allocation7], 1
    %s391 = scalar_lea.sflag [#allocation7], 1
    %392 = vsyncpa %s391, 1
    %393 = vsyncpa [#allocation5], 1
    %s394 = scalar_lea.sflag [#allocation5], 1
    %395 = vsyncpa %s394, 1

</llo_original>
